<compile_context>
chip_gen: v6e
topology: v6e:2x2x1
jax: 0.10.0
libtpu: 0.0.40
codegen_flags: <defaults>
</compile_context>

<pallas_src>
import functools

import jax
import jax.numpy as jnp
from jax.experimental import pallas as pl
from jax.experimental.pallas import tpu as pltpu


def _round_up(x, m):
    return (x + m - 1) // m * m


def _vmem_capacity_bytes():
    try:
        return int(pltpu.get_tpu_info().vmem_capacity_bytes)
    except Exception:
        return 64 << 20      # conservative (v7x-sized) fallback


def _choose_tiling(n, d_pad, agg_itemsize, row_tile_cap, vmem_limit):
    """Pick adj row-tile size / padding / buffering from the VMEM budget."""
    n8 = _round_up(n, 8)
    # Resident bytes independent of tm: activation window (counted twice to be
    # safe about output buffering), staged H scratch, W double buffer, slack.
    fixed = (2 * n8 * d_pad * 4
             + n8 * d_pad * agg_itemsize
             + 2 * d_pad * d_pad * agg_itemsize
             + 64 * d_pad * 4)
    per_row = n8 * agg_itemsize                      # one buffered adj row
    avail = max(vmem_limit - fixed, 2 * 8 * per_row)
    tm_budget = max(((avail // (2 * per_row)) // 8) * 8, 8)   # double-buffered
    tm = max(min(_round_up(max(int(row_tile_cap), 8), 8), tm_budget, n8), 8)
    # Minimize dead-row padding: fix the tile count, then shrink tm to fit.
    k = -(-n8 // tm)
    tm = _round_up(-(-n8 // k), 8)
    n_pad = tm * k
    # Deepen adj pipelining across layer-boundary bubbles only when VMEM allows.
    adj_buffers = 3 if (k >= 3 and avail >= 3 * tm * per_row) else 2
    return tm, n_pad, k, adj_buffers


def _fused_gcn_kernel(x_hbm, adj_ref, w_ref, b_ref, g_ref, be_ref,
                      out_ref, h_ref, sum_ref, sq_ref, scale_ref, shift_ref,
                      in_sem, *, inv_n, tm, eps):
    """Fused multi-layer GCN body. grid = (num_layers, num_row_tiles)."""
    layer = pl.program_id(0)
    tile = pl.program_id(1)
    last_layer = pl.num_programs(0) - 1
    last_tile = pl.num_programs(1) - 1

    # ---- layer prologue (first row tile) ----
    @pl.when(tile == 0)
    def _prologue():
        @pl.when(layer == 0)
        def _init():
            # One-time DMA of the padded input features straight into the
            # resident activation window (the kernel output block).
            cp = pltpu.make_async_copy(x_hbm, out_ref, in_sem)
            cp.start()
            cp.wait()
            # Identity "previous BN" so the fold below is uniform per layer.
            scale_ref[...] = jnp.ones_like(scale_ref)
            shift_ref[...] = jnp.zeros_like(shift_ref)

        # Zero this layer's BN statistic accumulators.
        sum_ref[...] = jnp.zeros_like(sum_ref)
        sq_ref[...] = jnp.zeros_like(sq_ref)

        # Fold the previous layer's BatchNorm affine into this layer's linear
        # input (no separate full-activation rewrite at the layer boundary),
        # then stage H = BN(f) @ W_l + b_l, cast ONCE to the aggregation dtype.
        # Padded rows of BN(f) may be nonzero (== shift), but adj's padded
        # columns are zero so they never feed real rows.
        f_bn = out_ref[...] * scale_ref[...] + shift_ref[...]
        h = jnp.dot(f_bn.astype(w_ref.dtype), w_ref[...],
                    preferred_element_type=jnp.float32) + b_ref[...]
        h_ref[...] = h.astype(h_ref.dtype)

    # ---- aggregation for this adj row tile: relu(adj_tile @ H) ----
    # The activation rows can be overwritten in place: H already captured
    # everything this layer needs from the previous activation.
    row0 = pl.multiple_of(tile * tm, tm)
    agg = jnp.dot(adj_ref[...], h_ref[...], preferred_element_type=jnp.float32)
    agg = jnp.maximum(agg, 0.0)
    out_ref[pl.ds(row0, tm), :] = agg

    # BN statistics accumulated while `agg` is still in vregs; this rides
    # under the MXU/DMA-bound aggregation instead of a serialized epilogue
    # re-read of the whole activation.
    sum_ref[...] += jnp.sum(agg, axis=0, keepdims=True)
    sq_ref[...] += jnp.sum(agg * agg, axis=0, keepdims=True)

    # ---- layer epilogue (last row tile): finalize BatchNorm1d ----
    @pl.when(tile == last_tile)
    def _epilogue():
        # Padded rows contribute exact zeros, so dividing by the REAL row
        # count gives correct batch stats (biased variance, eps=1e-9).
        # Single-pass E[x^2]-mean^2 with a >=0 guard; f32 accumulation.
        mean = sum_ref[...] * inv_n
        var = jnp.maximum(sq_ref[...] * inv_n - mean * mean, 0.0)
        scale = g_ref[...] * jax.lax.rsqrt(var + eps)
        shift = be_ref[...] - mean * scale
        scale_ref[...] = scale      # consumed by the next layer's prologue
        shift_ref[...] = shift

        @pl.when(layer == last_layer)
        def _finalize():
            # Only the final layer materializes BN into the output.
            out_ref[...] = out_ref[...] * scale + shift


def vanila_gcn_forward(f_in, adj, weights, biases, gammas, betas, *,
                       eps=1e-9, row_tile=1024, aggregate_dtype=jnp.bfloat16,
                       vmem_limit_bytes=None):
    """Runs the full VANILA_GCN forward pass in one pallas_call."""
    n, in_dim = f_in.shape
    out_dim = weights[0].shape[1]
    num_layers = len(weights)
    f32 = jnp.float32
    agg_dtype = jnp.dtype(aggregate_dtype)

    # Lane-dense feature dim shared by every layer (zero-padded, exact).
    d_pad = _round_up(max(in_dim, out_dim), 128)

    if vmem_limit_bytes is None:
        cap = _vmem_capacity_bytes()
        vmem_limit_bytes = max(min(int(cap * 0.8), 100 << 20), 32 << 20)

    tm, n_pad, n_tiles, adj_buffers = _choose_tiling(
        n, d_pad, agg_dtype.itemsize, row_tile, vmem_limit_bytes)

    # Padded operands. Zero padding is exact: padded feature columns stay 0
    # through linear/aggregate/relu/BN (gamma, beta padded with 0) and adj's
    # padded columns are 0 so padded rows never feed real rows.
    x_p = jnp.zeros((n_pad, d_pad), f32).at[:n, :in_dim].set(f_in.astype(f32))
    adj_p = jnp.zeros((n_pad, n_pad), f32).at[:n, :n].set(adj.astype(f32))
    adj_p = adj_p.astype(agg_dtype)

    w_stack = jnp.zeros((num_layers, d_pad, d_pad), f32)
    b_stack = jnp.zeros((num_layers, 1, d_pad), f32)
    g_stack = jnp.zeros((num_layers, 1, d_pad), f32)
    be_stack = jnp.zeros((num_layers, 1, d_pad), f32)
    for li, (w, b, g, be) in enumerate(zip(weights, biases, gammas, betas)):
        di, do = w.shape
        w_stack = w_stack.at[li, :di, :do].set(w.astype(f32))
        b_stack = b_stack.at[li, 0, :do].set(b.astype(f32))
        g_stack = g_stack.at[li, 0, :do].set(g.astype(f32))
        be_stack = be_stack.at[li, 0, :do].set(be.astype(f32))
    # Linear matmul runs in the aggregation dtype (f32 accumulation); cheaper
    # on v5e's MXU and a no-op for the exact f32 path.
    w_stack = w_stack.astype(agg_dtype)

    kernel = functools.partial(_fused_gcn_kernel,
                               inv_n=1.0 / float(n), tm=tm, eps=float(eps))

    adj_bytes = agg_dtype.itemsize
    cost = pl.CostEstimate(
        flops=int(2 * num_layers * (n_pad * d_pad * d_pad
                                    + n_pad * n_pad * d_pad)),
        transcendentals=int(num_layers * d_pad),
        bytes_accessed=int(num_layers * n_pad * n_pad * adj_bytes
                           + 2 * n_pad * d_pad * 4
                           + num_layers * (d_pad * d_pad * adj_bytes
                                           + 3 * d_pad * 4)),
    )

    adj_spec_kwargs = {}
    if adj_buffers != 2:
        # Third buffer lets the adj DMA run ahead through the serialized
        # prologue/epilogue steps at layer boundaries.
        adj_spec_kwargs["pipeline_mode"] = pl.Buffered(adj_buffers)
    adj_spec = pl.BlockSpec((tm, n_pad), lambda l, i: (i, 0), **adj_spec_kwargs)

    grid_spec = pltpu.PrefetchScalarGridSpec(
        num_scalar_prefetch=0,
        grid=(num_layers, n_tiles),
        in_specs=[
            pl.BlockSpec(memory_space=pl.ANY),                            # x: raw HBM, DMA'd once
            adj_spec,                                                     # adj row tile (streamed)
            pl.BlockSpec((None, d_pad, d_pad), lambda l, i: (l, 0, 0)),   # W_l
            pl.BlockSpec((None, 1, d_pad), lambda l, i: (l, 0, 0)),       # b_l
            pl.BlockSpec((None, 1, d_pad), lambda l, i: (l, 0, 0)),       # gamma_l
            pl.BlockSpec((None, 1, d_pad), lambda l, i: (l, 0, 0)),       # beta_l
        ],
        out_specs=pl.BlockSpec((n_pad, d_pad), lambda l, i: (0, 0)),      # resident activation
        scratch_shapes=[
            pltpu.VMEM((n_pad, d_pad), agg_dtype),   # staged H (cast once per layer)
            pltpu.VMEM((1, d_pad), f32),             # BN sum accumulator
            pltpu.VMEM((1, d_pad), f32),             # BN sum-of-squares accumulator
            pltpu.VMEM((1, d_pad), f32),             # previous-layer BN scale
            pltpu.VMEM((1, d_pad), f32),             # previous-layer BN shift
            pltpu.SemaphoreType.DMA(()),             # one-time x -> activation DMA
        ],
    )

    out_p = pl.pallas_call(
        kernel,
        out_shape=jax.ShapeDtypeStruct((n_pad, d_pad), f32),
        grid_spec=grid_spec,
        compiler_params=pltpu.CompilerParams(
            # Both axes carry VMEM-scratch state -> sequential grid.
            dimension_semantics=("arbitrary", "arbitrary"),
            vmem_limit_bytes=int(vmem_limit_bytes),
        ),
        cost_estimate=cost,
    )(x_p, adj_p, w_stack, b_stack, g_stack, be_stack)

    return out_p[:n, :out_dim]


def vanila_gcn_reference(f_in, adj, weights, biases, gammas, betas, eps=1e-9):
    """Pure-JAX reference mirroring the PyTorch forward (for self-check)."""
    f = f_in
    for w, b, g, be in zip(weights, biases, gammas, betas):
        f = f @ w + b
        f = adj @ f
        f = jnp.maximum(f, 0.0)
        mean = jnp.mean(f, axis=0, keepdims=True)
        var = jnp.mean((f - mean) ** 2, axis=0, keepdims=True)
        f = g * (f - mean) * jax.lax.rsqrt(var + eps) + be
    return f


def xavier_uniform(key, fan_in, fan_out):
    bound = jnp.sqrt(6.0 / (fan_in + fan_out))
    return jax.random.uniform(key, (fan_in, fan_out), jnp.float32,
                              minval=-bound, maxval=bound)


if __name__ == "__main__":
    # Small deterministic problem: N nodes, feature dims in_dim -> out_dim.
    num_layer = 2
    N, in_dim, out_dim = 16, 8, 32

    key = jax.random.PRNGKey(0)
    k_adj, k_x, *k_ws = jax.random.split(key, 2 + num_layer)

    # Symmetric row-normalized random adjacency (dense stand-in for sparse adj).
    a = (jax.random.uniform(k_adj, (N, N)) > 0.6).astype(jnp.float32)
    a = jnp.maximum(a, a.T) + jnp.eye(N, dtype=jnp.float32)
    deg = jnp.sum(a, axis=1, keepdims=True)
    adj = a / deg

    # Input node features.
    x = jax.random.normal(k_x, (N, in_dim), jnp.float32)

    # Parameters: xavier-uniform weights, zero biases, BN gamma=1 / beta=0.
    weights, biases, gammas, betas = [], [], [], []
    dims = [in_dim] + [out_dim] * num_layer
    for i in range(num_layer):
        weights.append(xavier_uniform(k_ws[i], dims[i], dims[i + 1]))
        biases.append(jnp.zeros((dims[i + 1],), jnp.float32))
        gammas.append(jnp.ones((dims[i + 1],), jnp.float32))
        betas.append(jnp.zeros((dims[i + 1],), jnp.float32))

    ref = vanila_gcn_reference(x, adj, weights, biases, gammas, betas)

    # Exact-precision path (f32 adj / weights): bit-faithful to the module.
    out_f32 = vanila_gcn_forward(x, adj, weights, biases, gammas, betas,
                                 aggregate_dtype=jnp.float32)
    out_f32 = jax.block_until_ready(out_f32)
    assert out_f32.shape == (N, out_dim)
    assert bool(jnp.all(jnp.isfinite(out_f32)))
    err_f32 = float(jnp.max(jnp.abs(out_f32 - ref)))
    assert err_f32 < 1e-3, f"f32 path max abs error vs reference: {err_f32}"

    # Default bandwidth-optimized path (bf16 adj / H / W, f32 accumulation):
    # ~2x less HBM traffic on the dominant N^2 stream; looser tolerance
    # reflects bf16 rounding of the aggregation inputs.
    out_bf16 = vanila_gcn_forward(x, adj, weights, biases, gammas, betas)
    out_bf16 = jax.block_until_ready(out_bf16)
    assert out_bf16.shape == (N, out_dim)
    assert bool(jnp.all(jnp.isfinite(out_bf16)))
    err_bf16 = float(jnp.max(jnp.abs(out_bf16 - ref)))
    assert err_bf16 < 2.5e-1, f"bf16 path max abs error vs reference: {err_bf16}"

    print("KERNEL_OK")
</pallas_src>

<mosaic_0001>
module attributes {stable_mosaic.version = 11 : i64} {
  func.func @_fused_gcn_kernel(%arg0: i32, %arg1: i32, %arg2: memref<16x128xf32, #tpu.memory_space<any>>, %arg3: memref<16x16xf32, #tpu.memory_space<vmem>>, %arg4: memref<1x128x128xf32, #tpu.memory_space<vmem>>, %arg5: memref<1x1x128xf32, #tpu.memory_space<vmem>>, %arg6: memref<1x1x128xf32, #tpu.memory_space<vmem>>, %arg7: memref<1x1x128xf32, #tpu.memory_space<vmem>>, %arg8: memref<16x128xf32, #tpu.memory_space<vmem>>, %arg9: memref<16x128xf32, #tpu.memory_space<vmem>>, %arg10: memref<1x128xf32, #tpu.memory_space<vmem>>, %arg11: memref<1x128xf32, #tpu.memory_space<vmem>>, %arg12: memref<1x128xf32, #tpu.memory_space<vmem>>, %arg13: memref<1x128xf32, #tpu.memory_space<vmem>>, %arg14: memref<!tpu.dma_semaphore, #tpu.memory_space<semaphore_mem>>) attributes {dimension_semantics = [#tpu.dimension_semantics<arbitrary>, #tpu.dimension_semantics<arbitrary>], iteration_bounds = array<i64: 2, 1>, scalar_prefetch = 0 : i64, scratch_operands = 6 : i64, tpu.core_type = #tpu.core_type<tc>, window_params = [{}, {transform_indices = @transform_1, window_bounds = array<i64: 16, 16>}, {transform_indices = @transform_2, window_bounds = array<i64: 1, 128, 128>}, {transform_indices = @transform_3, window_bounds = array<i64: 1, 1, 128>}, {transform_indices = @transform_4, window_bounds = array<i64: 1, 1, 128>}, {transform_indices = @transform_5, window_bounds = array<i64: 1, 1, 128>}, {pipeline_mode = #tpu.pipeline_mode<synchronous>, transform_indices = @transform_6, window_bounds = array<i64: 16, 128>}]} {
    %c0_i32 = arith.constant 0 : i32
    %0 = arith.cmpi eq, %arg1, %c0_i32 : i32
    %1 = arith.extui %0 : i1 to i32
    %c0_i32_0 = arith.constant 0 : i32
    %2 = arith.cmpi ne, %1, %c0_i32_0 : i32
    scf.if %2 {
      %c0_i32_18 = arith.constant 0 : i32
      %26 = arith.cmpi eq, %arg0, %c0_i32_18 : i32
      %27 = arith.extui %26 : i1 to i32
      %c0_i32_19 = arith.constant 0 : i32
      %28 = arith.cmpi ne, %27, %c0_i32_19 : i32
      scf.if %28 {
        tpu.enqueue_dma source(%arg2 : memref<16x128xf32, #tpu.memory_space<any>>) target(%arg8 : memref<16x128xf32, #tpu.memory_space<vmem>>) target_semaphore(%arg14 : memref<!tpu.dma_semaphore, #tpu.memory_space<semaphore_mem>>)
        tpu.wait_dma2 semaphore(%arg14 : memref<!tpu.dma_semaphore, #tpu.memory_space<semaphore_mem>>) src(%arg2 : memref<16x128xf32, #tpu.memory_space<any>>) dst(%arg8 : memref<16x128xf32, #tpu.memory_space<vmem>>)
        %cst_41 = arith.constant 1.000000e+00 : f32
        %48 = vector.broadcast %cst_41 : f32 to vector<1x128xf32>
        %c0_42 = arith.constant 0 : index
        %c0_43 = arith.constant 0 : index
        %49 = vector.load %arg12[%c0_42, %c0_43] : memref<1x128xf32, #tpu.memory_space<vmem>>, vector<1x128xf32>
        tpu.vector_store %arg12[%c0_42, %c0_43], %48 {strides = array<i32>} : memref<1x128xf32, #tpu.memory_space<vmem>>, vector<1x128xf32>,
        %cst_44 = arith.constant 0.000000e+00 : f32
        %50 = vector.broadcast %cst_44 : f32 to vector<1x128xf32>
        %c0_45 = arith.constant 0 : index
        %c0_46 = arith.constant 0 : index
        %51 = vector.load %arg13[%c0_45, %c0_46] : memref<1x128xf32, #tpu.memory_space<vmem>>, vector<1x128xf32>
        tpu.vector_store %arg13[%c0_45, %c0_46], %50 {strides = array<i32>} : memref<1x128xf32, #tpu.memory_space<vmem>>, vector<1x128xf32>,
      } else {
      }
      %cst_20 = arith.constant 0.000000e+00 : f32
      %29 = vector.broadcast %cst_20 : f32 to vector<1x128xf32>
      %c0_21 = arith.constant 0 : index
      %c0_22 = arith.constant 0 : index
      %30 = vector.load %arg10[%c0_21, %c0_22] : memref<1x128xf32, #tpu.memory_space<vmem>>, vector<1x128xf32>
      tpu.vector_store %arg10[%c0_21, %c0_22], %29 {strides = array<i32>} : memref<1x128xf32, #tpu.memory_space<vmem>>, vector<1x128xf32>,
      %cst_23 = arith.constant 0.000000e+00 : f32
      %31 = vector.broadcast %cst_23 : f32 to vector<1x128xf32>
      %c0_24 = arith.constant 0 : index
      %c0_25 = arith.constant 0 : index
      %32 = vector.load %arg11[%c0_24, %c0_25] : memref<1x128xf32, #tpu.memory_space<vmem>>, vector<1x128xf32>
      tpu.vector_store %arg11[%c0_24, %c0_25], %31 {strides = array<i32>} : memref<1x128xf32, #tpu.memory_space<vmem>>, vector<1x128xf32>,
      %c0_26 = arith.constant 0 : index
      %c0_27 = arith.constant 0 : index
      %33 = vector.load %arg8[%c0_26, %c0_27] : memref<16x128xf32, #tpu.memory_space<vmem>>, vector<16x128xf32>
      %c0_28 = arith.constant 0 : index
      %c0_29 = arith.constant 0 : index
      %34 = vector.load %arg12[%c0_28, %c0_29] : memref<1x128xf32, #tpu.memory_space<vmem>>, vector<1x128xf32>
      %35 = vector.broadcast %34 : vector<1x128xf32> to vector<16x128xf32>
      %36 = arith.mulf %33, %35 : vector<16x128xf32>
      %c0_30 = arith.constant 0 : index
      %c0_31 = arith.constant 0 : index
      %37 = vector.load %arg13[%c0_30, %c0_31] : memref<1x128xf32, #tpu.memory_space<vmem>>, vector<1x128xf32>
      %38 = vector.broadcast %37 : vector<1x128xf32> to vector<16x128xf32>
      %39 = arith.addf %36, %38 : vector<16x128xf32>
      %c0_32 = arith.constant 0 : index
      %c0_33 = arith.constant 0 : index
      %c0_34 = arith.constant 0 : index
      %40 = vector.load %arg4[%c0_32, %c0_33, %c0_34] : memref<1x128x128xf32, #tpu.memory_space<vmem>>, vector<1x128x128xf32>
      %41 = vector.shape_cast %40 : vector<1x128x128xf32> to vector<128x128xf32>
      %cst_35 = arith.constant dense<0.000000e+00> : vector<16x128xf32>
      %42 = tpu.matmul %39, %41, %cst_35 {dimension_numbers = #tpu.dot_dimension_numbers<[1], [0], [0], [1], [0, 0, 1, 1], [], []>} : vector<16x128xf32>, vector<128x128xf32>, vector<16x128xf32> -> vector<16x128xf32>
      %c0_36 = arith.constant 0 : index
      %c0_37 = arith.constant 0 : index
      %c0_38 = arith.constant 0 : index
      %43 = vector.load %arg5[%c0_36, %c0_37, %c0_38] : memref<1x1x128xf32, #tpu.memory_space<vmem>>, vector<1x1x128xf32>
      %44 = vector.shape_cast %43 : vector<1x1x128xf32> to vector<1x128xf32>
      %45 = vector.broadcast %44 : vector<1x128xf32> to vector<16x128xf32>
      %46 = arith.addf %42, %45 : vector<16x128xf32>
      %c0_39 = arith.constant 0 : index
      %c0_40 = arith.constant 0 : index
      %47 = vector.load %arg9[%c0_39, %c0_40] : memref<16x128xf32, #tpu.memory_space<vmem>>, vector<16x128xf32>
      tpu.vector_store %arg9[%c0_39, %c0_40], %46 {strides = array<i32>} : memref<16x128xf32, #tpu.memory_space<vmem>>, vector<16x128xf32>,
    } else {
    }
    %c16_i32 = arith.constant 16 : i32
    %3 = arith.muli %arg1, %c16_i32 : i32
    %4 = tpu.assume_multiple %3, 16 : i32
    %c0 = arith.constant 0 : index
    %c0_1 = arith.constant 0 : index
    %5 = vector.load %arg3[%c0, %c0_1] : memref<16x16xf32, #tpu.memory_space<vmem>>, vector<16x16xf32>
    %c0_2 = arith.constant 0 : index
    %c0_3 = arith.constant 0 : index
    %6 = vector.load %arg9[%c0_2, %c0_3] : memref<16x128xf32, #tpu.memory_space<vmem>>, vector<16x128xf32>
    %cst = arith.constant dense<0.000000e+00> : vector<16x128xf32>
    %7 = tpu.matmul %5, %6, %cst {dimension_numbers = #tpu.dot_dimension_numbers<[1], [0], [0], [1], [0, 0, 1, 1], [], []>} : vector<16x16xf32>, vector<16x128xf32>, vector<16x128xf32> -> vector<16x128xf32>
    %cst_4 = arith.constant 0.000000e+00 : f32
    %8 = vector.broadcast %cst_4 : f32 to vector<16x128xf32>
    %9 = arith.maximumf %7, %8 : vector<16x128xf32>
    %10 = arith.index_cast %4 : i32 to index
    %c0_5 = arith.constant 0 : index
    %11 = vector.load %arg8[%10, %c0_5] : memref<16x128xf32, #tpu.memory_space<vmem>>, vector<16x128xf32>
    tpu.vector_store %arg8[%10, %c0_5], %9 {strides = array<i32>} : memref<16x128xf32, #tpu.memory_space<vmem>>, vector<16x128xf32>,
    %c0_6 = arith.constant 0 : index
    %c0_7 = arith.constant 0 : index
    %12 = vector.load %arg10[%c0_6, %c0_7] : memref<1x128xf32, #tpu.memory_space<vmem>>, vector<1x128xf32>
    %cst_8 = arith.constant dense<0.000000e+00> : vector<128xf32>
    %13 = vector.multi_reduction <add>, %9, %cst_8 [0] : vector<16x128xf32> to vector<128xf32>
    %14 = vector.shape_cast %13 : vector<128xf32> to vector<1x128xf32>
    %15 = arith.addf %12, %14 : vector<1x128xf32>
    %c0_9 = arith.constant 0 : index
    %c0_10 = arith.constant 0 : index
    %16 = vector.load %arg10[%c0_9, %c0_10] : memref<1x128xf32, #tpu.memory_space<vmem>>, vector<1x128xf32>
    tpu.vector_store %arg10[%c0_9, %c0_10], %15 {strides = array<i32>} : memref<1x128xf32, #tpu.memory_space<vmem>>, vector<1x128xf32>,
    %c0_11 = arith.constant 0 : index
    %c0_12 = arith.constant 0 : index
    %17 = vector.load %arg11[%c0_11, %c0_12] : memref<1x128xf32, #tpu.memory_space<vmem>>, vector<1x128xf32>
    %18 = arith.mulf %9, %9 : vector<16x128xf32>
    %cst_13 = arith.constant dense<0.000000e+00> : vector<128xf32>
    %19 = vector.multi_reduction <add>, %18, %cst_13 [0] : vector<16x128xf32> to vector<128xf32>
    %20 = vector.shape_cast %19 : vector<128xf32> to vector<1x128xf32>
    %21 = arith.addf %17, %20 : vector<1x128xf32>
    %c0_14 = arith.constant 0 : index
    %c0_15 = arith.constant 0 : index
    %22 = vector.load %arg11[%c0_14, %c0_15] : memref<1x128xf32, #tpu.memory_space<vmem>>, vector<1x128xf32>
    tpu.vector_store %arg11[%c0_14, %c0_15], %21 {strides = array<i32>} : memref<1x128xf32, #tpu.memory_space<vmem>>, vector<1x128xf32>,
    %c0_i32_16 = arith.constant 0 : i32
    %23 = arith.cmpi eq, %arg1, %c0_i32_16 : i32
    %24 = arith.extui %23 : i1 to i32
    %c0_i32_17 = arith.constant 0 : i32
    %25 = arith.cmpi ne, %24, %c0_i32_17 : i32
    scf.if %25 {
      %c0_18 = arith.constant 0 : index
      %c0_19 = arith.constant 0 : index
      %26 = vector.load %arg10[%c0_18, %c0_19] : memref<1x128xf32, #tpu.memory_space<vmem>>, vector<1x128xf32>
      %cst_20 = arith.constant 6.250000e-02 : f32
      %27 = vector.broadcast %cst_20 : f32 to vector<1x128xf32>
      %28 = arith.mulf %26, %27 : vector<1x128xf32>
      %c0_21 = arith.constant 0 : index
      %c0_22 = arith.constant 0 : index
      %29 = vector.load %arg11[%c0_21, %c0_22] : memref<1x128xf32, #tpu.memory_space<vmem>>, vector<1x128xf32>
      %cst_23 = arith.constant 6.250000e-02 : f32
      %30 = vector.broadcast %cst_23 : f32 to vector<1x128xf32>
      %31 = arith.mulf %29, %30 : vector<1x128xf32>
      %32 = arith.mulf %28, %28 : vector<1x128xf32>
      %33 = arith.subf %31, %32 : vector<1x128xf32>
      %cst_24 = arith.constant 0.000000e+00 : f32
      %34 = vector.broadcast %cst_24 : f32 to vector<1x128xf32>
      %35 = arith.maximumf %33, %34 : vector<1x128xf32>
      %c0_25 = arith.constant 0 : index
      %c0_26 = arith.constant 0 : index
      %c0_27 = arith.constant 0 : index
      %36 = vector.load %arg6[%c0_25, %c0_26, %c0_27] : memref<1x1x128xf32, #tpu.memory_space<vmem>>, vector<1x1x128xf32>
      %37 = vector.shape_cast %36 : vector<1x1x128xf32> to vector<1x128xf32>
      %cst_28 = arith.constant 9.99999971E-10 : f32
      %38 = vector.broadcast %cst_28 : f32 to vector<1x128xf32>
      %39 = arith.addf %35, %38 : vector<1x128xf32>
      %40 = math.rsqrt %39 : vector<1x128xf32>
      %41 = arith.mulf %37, %40 : vector<1x128xf32>
      %c0_29 = arith.constant 0 : index
      %c0_30 = arith.constant 0 : index
      %c0_31 = arith.constant 0 : index
      %42 = vector.load %arg7[%c0_29, %c0_30, %c0_31] : memref<1x1x128xf32, #tpu.memory_space<vmem>>, vector<1x1x128xf32>
      %43 = vector.shape_cast %42 : vector<1x1x128xf32> to vector<1x128xf32>
      %44 = arith.mulf %28, %41 : vector<1x128xf32>
      %45 = arith.subf %43, %44 : vector<1x128xf32>
      %c0_32 = arith.constant 0 : index
      %c0_33 = arith.constant 0 : index
      %46 = vector.load %arg12[%c0_32, %c0_33] : memref<1x128xf32, #tpu.memory_space<vmem>>, vector<1x128xf32>
      tpu.vector_store %arg12[%c0_32, %c0_33], %41 {strides = array<i32>} : memref<1x128xf32, #tpu.memory_space<vmem>>, vector<1x128xf32>,
      %c0_34 = arith.constant 0 : index
      %c0_35 = arith.constant 0 : index
      %47 = vector.load %arg13[%c0_34, %c0_35] : memref<1x128xf32, #tpu.memory_space<vmem>>, vector<1x128xf32>
      tpu.vector_store %arg13[%c0_34, %c0_35], %45 {strides = array<i32>} : memref<1x128xf32, #tpu.memory_space<vmem>>, vector<1x128xf32>,
      %c1_i32 = arith.constant 1 : i32
      %48 = arith.cmpi eq, %arg0, %c1_i32 : i32
      %49 = arith.extui %48 : i1 to i32
      %c0_i32_36 = arith.constant 0 : i32
      %50 = arith.cmpi ne, %49, %c0_i32_36 : i32
      scf.if %50 {
        %c0_37 = arith.constant 0 : index
        %c0_38 = arith.constant 0 : index
        %51 = vector.load %arg8[%c0_37, %c0_38] : memref<16x128xf32, #tpu.memory_space<vmem>>, vector<16x128xf32>
        %52 = vector.broadcast %41 : vector<1x128xf32> to vector<16x128xf32>
        %53 = arith.mulf %51, %52 : vector<16x128xf32>
        %54 = vector.broadcast %45 : vector<1x128xf32> to vector<16x128xf32>
        %55 = arith.addf %53, %54 : vector<16x128xf32>
        %c0_39 = arith.constant 0 : index
        %c0_40 = arith.constant 0 : index
        %56 = vector.load %arg8[%c0_39, %c0_40] : memref<16x128xf32, #tpu.memory_space<vmem>>, vector<16x128xf32>
        tpu.vector_store %arg8[%c0_39, %c0_40], %55 {strides = array<i32>} : memref<16x128xf32, #tpu.memory_space<vmem>>, vector<16x128xf32>,
      } else {
      }
    } else {
    }
    return
  }
  func.func @transform_1(%arg0: i32, %arg1: i32) -> (i32, i32) {
    %c0_i32 = arith.constant 0 : i32
    %c0_i32_0 = arith.constant 0 : i32
    return %arg1, %c0_i32 : i32, i32
  }
  func.func @transform_2(%arg0: i32, %arg1: i32) -> (i32, i32, i32) {
    %c0_i32 = arith.constant 0 : i32
    %c0_i32_0 = arith.constant 0 : i32
    %c0_i32_1 = arith.constant 0 : i32
    return %arg0, %c0_i32, %c0_i32_0 : i32, i32, i32
  }
  func.func @transform_3(%arg0: i32, %arg1: i32) -> (i32, i32, i32) {
    %c0_i32 = arith.constant 0 : i32
    %c0_i32_0 = arith.constant 0 : i32
    %c0_i32_1 = arith.constant 0 : i32
    return %arg0, %c0_i32, %c0_i32_0 : i32, i32, i32
  }
  func.func @transform_4(%arg0: i32, %arg1: i32) -> (i32, i32, i32) {
    %c0_i32 = arith.constant 0 : i32
    %c0_i32_0 = arith.constant 0 : i32
    %c0_i32_1 = arith.constant 0 : i32
    return %arg0, %c0_i32, %c0_i32_0 : i32, i32, i32
  }
  func.func @transform_5(%arg0: i32, %arg1: i32) -> (i32, i32, i32) {
    %c0_i32 = arith.constant 0 : i32
    %c0_i32_0 = arith.constant 0 : i32
    %c0_i32_1 = arith.constant 0 : i32
    return %arg0, %c0_i32, %c0_i32_0 : i32, i32, i32
  }
  func.func @transform_6(%arg0: i32, %arg1: i32) -> (i32, i32) {
    %c0_i32 = arith.constant 0 : i32
    %c0_i32_0 = arith.constant 0 : i32
    %c0_i32_1 = arith.constant 0 : i32
    return %c0_i32, %c0_i32_0 : i32, i32
  }
}

</mosaic_0001>

<llo_original>
// kernel: tpu_custom_call.1
$region0: #{tpu_custom_call.1}
  #allocation0 [shape = 'u32[]', space=smem, size = 0x4, offset = 0x4, fixed_abs, tag = 'smem constant byte address 0x4 - core index']
  #allocation1 [shape = 'u32[144,128]{1,0:T(1,128)}', space=vmem, size = 0x12000, scoped, tag = 'internal scratch']
  #allocation2 [shape = 'f32[16,128]{1,0:T(8,128)}', space=vmem, size = 0x2000, scoped, tag = 'scratch operand']
  #allocation3 [shape = 'f32[1,128]{1,0:T(1,128)}', space=vmem, size = 0x200, scoped, tag = 'scratch operand']
  #allocation4 [shape = 'f32[1,128]{1,0:T(1,128)}', space=vmem, size = 0x200, scoped, tag = 'scratch operand']
  #allocation5 [shape = 'f32[1,128]{1,0:T(1,128)}', space=vmem, size = 0x200, scoped, tag = 'scratch operand']
  #allocation6 [shape = 'f32[1,128]{1,0:T(1,128)}', space=vmem, size = 0x200, scoped, tag = 'scratch operand']
  #allocation7 [shape = 's32[1]{0}', space=sflag, size = 0x4, scoped, tag = 'scratch operand']
  #allocation14 [shape = 's32[]', space=sflag, size = 0x4, offset = 0, fixed_abs, tag = 'sflag constant byte address 0x0 - dummy sync flag']
  #allocation15 [shape = 's32[]', space=sflag, size = 0x4, offset = 0, fixed_abs, tag = 'sflag constant byte address 0x0 - dummy sync flag']
  #allocation16 [shape = 'u32[]', space=smem, size = 0x4, offset = 0x44, fixed_abs, tag = 'smem constant byte address 0x44 - assertion arg 0']
  #allocation17 [shape = 'u32[]', space=smem, size = 0x4, offset = 0x48, fixed_abs, tag = 'smem constant byte address 0x48 - assertion arg 1']
  %s0 = inlined_call_operand.hbm [shape: f32[16,128], index: 0, kind: input, shape index: {}]
  %s1 = inlined_call_operand.hbm [shape: f32[16,16], index: 1, kind: input, shape index: {}]
  %s2 = inlined_call_operand.hbm [shape: f32[2,128,128], index: 2, kind: input, shape index: {}]
  %s3 = inlined_call_operand.vmem [shape: f32[2,1,128], index: 3, kind: input, shape index: {}]
  %s4 = inlined_call_operand.vmem [shape: f32[2,1,128], index: 4, kind: input, shape index: {}]
  %s5 = inlined_call_operand.vmem [shape: f32[2,1,128], index: 5, kind: input, shape index: {}]
  %s6 = inlined_call_operand.hbm [shape: f32[16,128], index: 6, kind: output, shape index: {}]
  %s7 = sld [smem:[#allocation0]]
  $region81: #{tpu_custom_call.1} parent=0
    _
  %s9 = ssub.s32 1, %s7
  %s10 = scalar_select 0, %s9, %s7
  $region1: #{tpu_custom_call.1} parent=0
    #allocation8 [shape = 'u8[8192]{0}', space=vmem, size = 0x2000, scoped, tag = 'input window, operand 1, single buffered']
    #allocation9 [shape = 's32[2]{0}', space=sflag, size = 0x8, scoped, tag = 'scoped memory for tpu_custom_call.1']
    #allocation10 [shape = 's32[2]{0}', space=sflag, size = 0x8, scoped, tag = 'scoped memory for tpu_custom_call.1']
    #allocation11 [shape = 'u8[131072]{0}', space=vmem, size = 0x20000, scoped, tag = 'input window, operand 2']
    #allocation12 [shape = 's32[2]{0}', space=sflag, size = 0x8, scoped, tag = 'scoped memory for tpu_custom_call.1']
    #allocation13 [shape = 'u8[8192]{0}', space=vmem, size = 0x2000, scoped, tag = 'output window, operand 0, single buffered']
    %11 = vsyncpa [#allocation9], 0
    %12 = vsyncpa [#allocation12], 0
    %s13 = scalar_lea.sflag [#allocation12], 1
    %14 = vsyncpa %s13, 0
    %15 = vsyncpa [#allocation10], 0
    loop: start=0, step=1, limit=4
    $region2: #{tpu_custom_call.1} parent=1 // loop_pre_header
      _
    $region3: #{tpu_custom_call.1} parent=1 // loop_header
      %s17 = sphi 0, %s21
      %p18 = scmp.ge.s32.totalorder %s17, 4
      %s24 = sphi 0, %s36
      %s25 = sphi 0, %s32
      %s26 = sphi 0, %s24
      %s27 = sphi 0, %s25
      %s28 = sphi 0, %s26
      %s29 = sphi 0, %s27
      %s39 = sphi 0, %s41
      %s42 = sphi 0, %s39
      %s43 = sphi 0, %s42
      %s59 = sphi 0, %s43
      %s65 = sphi 0, %s67
      %s68 = sphi 0, %s65
      %s69 = sphi 0, %s68
      %s85 = sphi 0, %s69
      %s91 = sphi 0, %s93
      %s94 = sphi 0, %s91
      %s95 = sphi 0, %s94
      %s111 = sphi 0, %s95
      %s117 = sphi 0, %s119
      %s120 = sphi 0, %s117
      %s121 = sphi 0, %s120
      %s137 = sphi 0, %s121
      %s143 = sphi 0, %s145
      %s146 = sphi 0, %s143
      %s147 = sphi 0, %s146
      %s163 = sphi 0, %s147
      %s167 = sphi 0, %s167
      %s169 = sphi 0, %s167
      %s170 = sphi 0, %s169
      %s184 = sphi 0, %s170
    $region4: #{tpu_custom_call.1} parent=1 // loop_header_branch
      %20 = sbr.rel (%p18) target = $region8
    $region5: #{tpu_custom_call.1} parent=1 // loop_body
      %s22 = ssub.s32 %s17, 1
      %s23 = ssub.s32 %s17, 2
      %s30 = sadd.s32 1, %s25
      %p31 = scmp.ge.s32.totalorder %s30, 1
      %s32 = scalar_select %p31, 0, %s30
      %s33 = sadd.s32 1, %s24
      %s34 = scalar_select %p31, %s33, %s24
      %p35 = scmp.ge.s32.totalorder %s34, 2
      %s36 = scalar_select %p35, 0, %s34
      %s37 = ssub.s32 %s25, %s32
      %p38 = scmp.eq.s32.totalorder %s37, 0
      %s40 = sadd.s32 %s39, 1
      %s41 = scalar_select %p38, %s39, %s40
      %p44 = pneg %p38
      %p45 = scmp.eq.s32.totalorder %s17, 1
      %p46 = por %p44, %p45
      %p47 = scmp.ne.s32.totalorder %s39, %s42
      %p48 = scmp.eq.s32.totalorder %s17, 0
      %p49 = por %p47, %p48
      %p50 = scmp.ne.s32.totalorder %s39, %s42
      %p51 = scmp.eq.s32.totalorder %s22, 1
      %p52 = por %p50, %p51
      %p53 = scmp.ne.s32.totalorder %s42, %s43
      %p54 = scmp.eq.s32.totalorder %s22, 0
      %p55 = por %p53, %p54
      %p56 = scmp.ne.s32.totalorder %s42, %s43
      %p57 = scmp.eq.s32.totalorder %s23, 1
      %p58 = por %p56, %p57
      %p60 = scmp.ne.s32.totalorder %s43, %s59
      %p61 = scmp.eq.s32.totalorder %s23, 0
      %p62 = por %p60, %p61
      %s63 = ssub.s32 %s24, %s36
      %p64 = scmp.eq.s32.totalorder %s63, 0
      %s66 = sadd.s32 %s65, 1
      %s67 = scalar_select %p64, %s65, %s66
      %p70 = pneg %p64
      %p71 = scmp.eq.s32.totalorder %s17, 1
      %p72 = por %p70, %p71
      %p73 = scmp.ne.s32.totalorder %s65, %s68
      %p74 = scmp.eq.s32.totalorder %s17, 0
      %p75 = por %p73, %p74
      %p76 = scmp.ne.s32.totalorder %s65, %s68
      %p77 = scmp.eq.s32.totalorder %s22, 1
      %p78 = por %p76, %p77
      %p79 = scmp.ne.s32.totalorder %s68, %s69
      %p80 = scmp.eq.s32.totalorder %s22, 0
      %p81 = por %p79, %p80
      %p82 = scmp.ne.s32.totalorder %s68, %s69
      %p83 = scmp.eq.s32.totalorder %s23, 1
      %p84 = por %p82, %p83
      %p86 = scmp.ne.s32.totalorder %s69, %s85
      %p87 = scmp.eq.s32.totalorder %s23, 0
      %p88 = por %p86, %p87
      %s89 = ssub.s32 %s24, %s36
      %p90 = scmp.eq.s32.totalorder %s89, 0
      %s92 = sadd.s32 %s91, 1
      %s93 = scalar_select %p90, %s91, %s92
      %p96 = pneg %p90
      %p97 = scmp.eq.s32.totalorder %s17, 1
      %p98 = por %p96, %p97
      %p99 = scmp.ne.s32.totalorder %s91, %s94
      %p100 = scmp.eq.s32.totalorder %s17, 0
      %p101 = por %p99, %p100
      %p102 = scmp.ne.s32.totalorder %s91, %s94
      %p103 = scmp.eq.s32.totalorder %s22, 1
      %p104 = por %p102, %p103
      %p105 = scmp.ne.s32.totalorder %s94, %s95
      %p106 = scmp.eq.s32.totalorder %s22, 0
      %p107 = por %p105, %p106
      %p108 = scmp.ne.s32.totalorder %s94, %s95
      %p109 = scmp.eq.s32.totalorder %s23, 1
      %p110 = por %p108, %p109
      %p112 = scmp.ne.s32.totalorder %s95, %s111
      %p113 = scmp.eq.s32.totalorder %s23, 0
      %p114 = por %p112, %p113
      %s115 = ssub.s32 %s24, %s36
      %p116 = scmp.eq.s32.totalorder %s115, 0
      %s118 = sadd.s32 %s117, 1
      %s119 = scalar_select %p116, %s117, %s118
      %p122 = pneg %p116
      %p123 = scmp.eq.s32.totalorder %s17, 1
      %p124 = por %p122, %p123
      %p125 = scmp.ne.s32.totalorder %s117, %s120
      %p126 = scmp.eq.s32.totalorder %s17, 0
      %p127 = por %p125, %p126
      %p128 = scmp.ne.s32.totalorder %s117, %s120
      %p129 = scmp.eq.s32.totalorder %s22, 1
      %p130 = por %p128, %p129
      %p131 = scmp.ne.s32.totalorder %s120, %s121
      %p132 = scmp.eq.s32.totalorder %s22, 0
      %p133 = por %p131, %p132
      %p134 = scmp.ne.s32.totalorder %s120, %s121
      %p135 = scmp.eq.s32.totalorder %s23, 1
      %p136 = por %p134, %p135
      %p138 = scmp.ne.s32.totalorder %s121, %s137
      %p139 = scmp.eq.s32.totalorder %s23, 0
      %p140 = por %p138, %p139
      %s141 = ssub.s32 %s24, %s36
      %p142 = scmp.eq.s32.totalorder %s141, 0
      %s144 = sadd.s32 %s143, 1
      %s145 = scalar_select %p142, %s143, %s144
      %p148 = pneg %p142
      %p149 = scmp.eq.s32.totalorder %s17, 1
      %p150 = por %p148, %p149
      %p151 = scmp.ne.s32.totalorder %s143, %s146
      %p152 = scmp.eq.s32.totalorder %s17, 0
      %p153 = por %p151, %p152
      %p154 = scmp.ne.s32.totalorder %s143, %s146
      %p155 = scmp.eq.s32.totalorder %s22, 1
      %p156 = por %p154, %p155
      %p157 = scmp.ne.s32.totalorder %s146, %s147
      %p158 = scmp.eq.s32.totalorder %s22, 0
      %p159 = por %p157, %p158
      %p160 = scmp.ne.s32.totalorder %s146, %s147
      %p161 = scmp.eq.s32.totalorder %s23, 1
      %p162 = por %p160, %p161
      %p164 = scmp.ne.s32.totalorder %s147, %s163
      %p165 = scmp.eq.s32.totalorder %s23, 0
      %p166 = por %p164, %p165
      %s168 = sadd.s32 %s167, 1
      %p171 = scmp.eq.s32.totalorder %s17, 1
      %p172 = scmp.ne.s32.totalorder %s167, %s169
      %p173 = scmp.eq.s32.totalorder %s17, 0
      %p174 = por %p172, %p173
      %p175 = scmp.ne.s32.totalorder %s167, %s169
      %p176 = scmp.eq.s32.totalorder %s22, 1
      %p177 = por %p175, %p176
      %p178 = scmp.ne.s32.totalorder %s169, %s170
      %p179 = scmp.eq.s32.totalorder %s22, 0
      %p180 = por %p178, %p179
      %p181 = scmp.ne.s32.totalorder %s169, %s170
      %p182 = scmp.eq.s32.totalorder %s23, 1
      %p183 = por %p181, %p182
      %p185 = scmp.ne.s32.totalorder %s170, %s184
      %p186 = scmp.eq.s32.totalorder %s23, 0
      %p187 = por %p185, %p186
      %p188 = scmp.le.s32.totalorder 1, %s17
      %p189 = scmp.lt.s32.totalorder %s17, 3
      %p190 = pnand %p188, %p189
      %p191 = pneg %p190
      // Predicated region
      $region9: #{tpu_custom_call.1} parent=5 // pred_check
        _
      $region10: #{tpu_custom_call.1} parent=5 // pred_check_branch
        %193 = sbr.rel (%p190) target = $region12
      $region11: #{tpu_custom_call.1} parent=5 // pred_region
        %s194 = ssub.s32 %s17, 1
        // Predicated region
        $region13: #{tpu_custom_call.1} parent=11 // pred_check
          %p195 = pneg %p55
        $region14: #{tpu_custom_call.1} parent=11 // pred_check_branch
          %197 = sbr.rel (%p195) target = $region16
        $region15: #{tpu_custom_call.1} parent=11 // pred_region
          %s198 = smul.u32 2, %s27
          %s200 = ssub.s32 256, 256
          %201 = vsyncadd [#allocation9], %s200
          %s202 = smul.addr %s198, 128
          %s203 = scalar_lea.hbm %s1, %s202
          %s204 = sshll.u32 [#allocation8], 4
          %s205 = int_to_ptr.vmem [resolvable:$true] %s204
          %210 = dma.hbm_to_vmem [thread:$0]  %s203, 256, %s205, [#allocation9], 128, 128, 8
        $region16: #{tpu_custom_call.1} parent=11 // pred_fallthru
          _
      $region12: #{tpu_custom_call.1} parent=5 // pred_fallthru
        _
      %p211 = scmp.lt.s32.totalorder %s17, 2
      // Predicated region
      $region17: #{tpu_custom_call.1} parent=5 // pred_check
        %p212 = pneg %p211
      $region18: #{tpu_custom_call.1} parent=5 // pred_check_branch
        %214 = sbr.rel (%p212) target = $region20
      $region19: #{tpu_custom_call.1} parent=5 // pred_region
        // Predicated region
        $region21: #{tpu_custom_call.1} parent=19 // pred_check
          %p215 = pneg %p75
        $region22: #{tpu_custom_call.1} parent=19 // pred_check_branch
          %217 = sbr.rel (%p215) target = $region24
        $region23: #{tpu_custom_call.1} parent=19 // pred_region
          %s218 = sand.u32 %s65, 1
          %s219 = scalar_lea.sflag [#allocation12], %s218
          %s220 = sand.u32 %s65, 1
          %s221 = smul.addr %s220, 128
          %s222 = scalar_lea.vmem [#allocation11], %s221
          %s224 = ssub.s32 2048, 2048
          %225 = vsyncadd %s219, %s224
          %s226 = smul.addr %s24, 16
          %s227 = smul.addr %s226, 128
          %s228 = scalar_lea.hbm %s2, %s227
          %s229 = sshll.u32 %s222, 4
          %s230 = int_to_ptr.vmem [resolvable:$true] %s229
          %235 = dma.hbm_to_vmem [thread:$0]  %s228, 2048, %s230, %s219, 128, 128, 8
        $region24: #{tpu_custom_call.1} parent=19 // pred_fallthru
          _
        // Predicated region
        $region25: #{tpu_custom_call.1} parent=19 // pred_check
          %p236 = pneg %p101
        $region26: #{tpu_custom_call.1} parent=19 // pred_check_branch
          %238 = sbr.rel (%p236) target = $region28
        $region27: #{tpu_custom_call.1} parent=19 // pred_region
          %p239 = scmp.lt.s32.totalorder %s24, 1
          %s240 = scalar_select %p239, %s24, 1
          %s241 = scalar_lea.vmem %s3, %s240
        $region28: #{tpu_custom_call.1} parent=19 // pred_fallthru
          _
        // Predicated region
        $region29: #{tpu_custom_call.1} parent=19 // pred_check
          %p242 = pneg %p127
        $region30: #{tpu_custom_call.1} parent=19 // pred_check_branch
          %244 = sbr.rel (%p242) target = $region32
        $region31: #{tpu_custom_call.1} parent=19 // pred_region
          %p245 = scmp.lt.s32.totalorder %s24, 1
          %s246 = scalar_select %p245, %s24, 1
          %s247 = scalar_lea.vmem %s4, %s246
        $region32: #{tpu_custom_call.1} parent=19 // pred_fallthru
          _
        // Predicated region
        $region33: #{tpu_custom_call.1} parent=19 // pred_check
          %p248 = pneg %p153
        $region34: #{tpu_custom_call.1} parent=19 // pred_check_branch
          %250 = sbr.rel (%p248) target = $region36
        $region35: #{tpu_custom_call.1} parent=19 // pred_region
          %p251 = scmp.lt.s32.totalorder %s24, 1
          %s252 = scalar_select %p251, %s24, 1
          %s253 = scalar_lea.vmem %s5, %s252
        $region36: #{tpu_custom_call.1} parent=19 // pred_fallthru
          _
      $region20: #{tpu_custom_call.1} parent=5 // pred_fallthru
        _
      %p254 = scmp.le.s32.totalorder 1, %s17
      %p255 = scmp.lt.s32.totalorder %s17, 3
      %p256 = pnand %p254, %p255
      %p257 = pneg %p256
      // Predicated region
      $region37: #{tpu_custom_call.1} parent=5 // pred_check
        _
      $region38: #{tpu_custom_call.1} parent=5 // pred_check_branch
        %259 = sbr.rel (%p256) target = $region40
      $region39: #{tpu_custom_call.1} parent=5 // pred_region
        %s260 = ssub.s32 %s17, 1
        // Predicated region
        $region41: #{tpu_custom_call.1} parent=39 // pred_check
          %p261 = pneg %p55
        $region42: #{tpu_custom_call.1} parent=39 // pred_check_branch
          %263 = sbr.rel (%p261) target = $region44
        $region43: #{tpu_custom_call.1} parent=39 // pred_region
          %264 = dma.done [#allocation9], 256
        $region44: #{tpu_custom_call.1} parent=39 // pred_fallthru
          _
        %s265 = sand.u32 %s68, 1
        %s266 = scalar_lea.sflag [#allocation12], %s265
        %s267 = sand.u32 %s68, 1
        %s268 = smul.addr %s267, 128
        %s269 = scalar_lea.vmem [#allocation11], %s268
        // Predicated region
        $region45: #{tpu_custom_call.1} parent=39 // pred_check
          %p270 = pneg %p81
        $region46: #{tpu_custom_call.1} parent=39 // pred_check_branch
          %272 = sbr.rel (%p270) target = $region48
        $region47: #{tpu_custom_call.1} parent=39 // pred_region
          %273 = dma.done %s266, 2048
        $region48: #{tpu_custom_call.1} parent=39 // pred_fallthru
          _
        %p274 = pneg %p55
        %p275 = pneg %p52
        %s276 = sand.u32 %s68, 1
        %s277 = scalar_lea.sflag [#allocation12], %s276
        %s278 = sand.u32 %s68, 1
        %s279 = smul.addr %s278, 128
        %s280 = scalar_lea.vmem [#allocation11], %s279
        %p281 = pneg %p81
        %p282 = pneg %p78
        %p283 = scmp.lt.s32.totalorder %s26, 1
        %s284 = scalar_select %p283, %s26, 1
        %s285 = scalar_lea.vmem %s3, %s284
        %p286 = pneg %p107
        %p287 = pneg %p104
        %p288 = scmp.lt.s32.totalorder %s26, 1
        %s289 = scalar_select %p288, %s26, 1
        %s290 = scalar_lea.vmem %s4, %s289
        %p291 = pneg %p133
        %p292 = pneg %p130
        %p293 = scmp.lt.s32.totalorder %s26, 1
        %s294 = scalar_select %p293, %s26, 1
        %s295 = scalar_lea.vmem %s5, %s294
        %p296 = pneg %p159
        %p297 = pneg %p156
        %p298 = pneg %p180
        %p299 = pneg %p177
        %s300 = smul.u32 2, %s27
        %p301 = scmp.lt.s32.totalorder %s26, 1
        %s302 = scalar_select %p301, %s26, 1
        %s303 = scalar_lea.vmem %s3, %s302
        %p304 = scmp.lt.s32.totalorder %s26, 1
        %s305 = scalar_select %p304, %s26, 1
        %s306 = scalar_lea.vmem %s4, %s305
        %p307 = scmp.lt.s32.totalorder %s26, 1
        %s308 = scalar_select %p307, %s26, 1
        %s309 = scalar_lea.vmem %s5, %s308
        %p310 = scmp.eq.s32.totalorder %s27, 0
        // Predicated region
        $region49: #{tpu_custom_call.1} parent=39 // pred_check
          %p311 = pneg %p310
        $region50: #{tpu_custom_call.1} parent=39 // pred_check_branch
          %313 = sbr.rel (%p311) target = $region52
        $region51: #{tpu_custom_call.1} parent=39 // pred_region
          %p314 = scmp.eq.s32.totalorder %s26, 0
          // Predicated region
          $region53: #{tpu_custom_call.1} parent=51 // pred_check
            %p315 = pneg %p314
          $region54: #{tpu_custom_call.1} parent=51 // pred_check_branch
            %317 = sbr.rel (%p315) target = $region56
          $region55: #{tpu_custom_call.1} parent=51 // pred_region
            // Predicated region
            $region57: #{tpu_custom_call.1} parent=55 // pred_check
              _
            $region58: #{tpu_custom_call.1} parent=55 // pred_check_branch
              %319 = sbr.rel target = $region60
            $region59: #{tpu_custom_call.1} parent=55 // pred_region
              %320 = sst [smem:[#allocation16]] [#allocation15]
              %321 = sst [smem:[#allocation17]] [#allocation14]
            $region60: #{tpu_custom_call.1} parent=55 // pred_fallthru
              _
            %323 = shalt.err (0)
            %s325 = sshll.u32 [#allocation13], 4
            %s326 = int_to_ptr.vmem [resolvable:$true] %s325
            %328 = dma.hbm_to_vmem [thread:$0]  %s0, 256, %s326, [#allocation7]
            %s329 = smul.u32 16, 1
            %s330 = sshll.u32 %s329, 4
            %331 = dma.done [#allocation7], %s330
            %332 = vst [vmem:[#allocation5] sm:$0x1] 1.0
            %333 = vst [vmem:[#allocation6] sm:$0x1] 0.0
          $region56: #{tpu_custom_call.1} parent=51 // pred_fallthru
            _
          %334 = vst [vmem:[#allocation3] sm:$0x1] 0.0
          %335 = vst [vmem:[#allocation4] sm:$0x1] 0.0
          %v336 = vld [vmem:[#allocation13] sm:$0xff]
          %v337 = vld [vmem:[#allocation13 + $0x8] sm:$0xff]
          %v338 = vld [vmem:[#allocation5] sm:$0x1]
          %v340 = vlaneseq
          %v341 = vshrl.u32 %v340, 7
          %v342 = vsub.s32 0, %v341
          %v343 = vrot.slane %v338, %v342
          %v345 = vmul.f32 %v336, %v343
          %v346 = vmul.f32 %v337, %v343
          %v347 = vld [vmem:[#allocation6] sm:$0x1]
          %v349 = vlaneseq
          %v350 = vshrl.u32 %v349, 7
          %v351 = vsub.s32 0, %v350
          %v352 = vrot.slane %v347, %v351
          %v354 = vadd.f32 %v345, %v352
          %v355 = vadd.f32 %v346, %v352
          %v356 = vld [vmem:[%s269] sm:$0xff]
          %v357 = vld [vmem:[%s269 + $0x8] sm:$0xff]
          %v358 = vld [vmem:[%s269 + $0x10] sm:$0xff]
          %v359 = vld [vmem:[%s269 + $0x18] sm:$0xff]
          %v360 = vld [vmem:[%s269 + $0x20] sm:$0xff]
          %v361 = vld [vmem:[%s269 + $0x28] sm:$0xff]
          %v362 = vld [vmem:[%s269 + $0x30] sm:$0xff]
          %v363 = vld [vmem:[%s269 + $0x38] sm:$0xff]
          %v364 = vld [vmem:[%s269 + $0x40] sm:$0xff]
          %v365 = vld [vmem:[%s269 + $0x48] sm:$0xff]
          %v366 = vld [vmem:[%s269 + $0x50] sm:$0xff]
          %v367 = vld [vmem:[%s269 + $0x58] sm:$0xff]
          %v368 = vld [vmem:[%s269 + $0x60] sm:$0xff]
          %v369 = vld [vmem:[%s269 + $0x68] sm:$0xff]
          %v370 = vld [vmem:[%s269 + $0x70] sm:$0xff]
          %v371 = vld [vmem:[%s269 + $0x78] sm:$0xff]
          %v372 = vld [vmem:[%s303] sm:$0x1]
          %v374 = vlaneseq
          %v375 = vshrl.u32 %v374, 7
          %v376 = vsub.s32 0, %v375
          %v377 = vrot.slane %v372, %v376
          %379 = vmatprep.subr.mxu0 0.0
          %380 = vmatpush1.msra.mxu0 %v371
          %381 = vmatprep.subr.mxu0 0.0
          %382 = vmatpush1.msra.mxu0 %v370
          %383 = vmatprep.subr.mxu0 0.0
          %384 = vmatpush1.msra.mxu0 %v369
          %385 = vmatprep.subr.mxu0 0.0
          %386 = vmatpush1.msra.mxu0 %v368
          %387 = vmatprep.subr.mxu0 0.0
          %388 = vmatpush1.msra.mxu0 %v367
          %389 = vmatprep.subr.mxu0 0.0
          %390 = vmatpush1.msra.mxu0 %v366
          %391 = vmatprep.subr.mxu0 0.0
          %392 = vmatpush1.msra.mxu0 %v365
          %393 = vmatprep.subr.mxu0 0.0
          %394 = vmatpush1.msra.mxu0 %v364
          %395 = vmatprep.subr.mxu0 0.0
          %396 = vmatpush1.msra.mxu0 %v363
          %397 = vmatprep.subr.mxu0 0.0
          %398 = vmatpush1.msra.mxu0 %v362
          %399 = vmatprep.subr.mxu0 0.0
          %400 = vmatpush1.msra.mxu0 %v361
          %401 = vmatprep.subr.mxu0 0.0
          %402 = vmatpush1.msra.mxu0 %v360
          %403 = vmatprep.subr.mxu0 0.0
          %404 = vmatpush1.msra.mxu0 %v359
          %405 = vmatprep.subr.mxu0 0.0
          %406 = vmatpush1.msra.mxu0 %v358
          %407 = vmatprep.subr.mxu0 0.0
          %408 = vmatpush1.msra.mxu0 %v357
          %409 = vmatprep.subr.mxu0 0.0
          %410 = vmatpush1.msra.mxu0 %v356
          %411 = vmatprep.subr.mxu0 0.0
          %412 = vmatpush2.msra.mxu0 0.0
          %413 = vmatprep.subr.mxu0 0.0
          %414 = vmatpush2.msra.mxu0 0.0
          %415 = vmatprep.subr.mxu0 0.0
          %416 = vmatpush2.msra.mxu0 0.0
          %417 = vmatprep.subr.mxu0 0.0
          %418 = vmatpush2.msra.mxu0 0.0
          %419 = vmatprep.subr.mxu0 0.0
          %420 = vmatpush2.msra.mxu0 0.0
          %421 = vmatprep.subr.mxu0 0.0
          %422 = vmatpush2.msra.mxu0 0.0
          %423 = vmatprep.subr.mxu0 0.0
          %424 = vmatpush2.msra.mxu0 0.0
          %425 = vmatprep.subr.mxu0 0.0
          %426 = vmatpush2.msra.mxu0 0.0
          %427 = vmatprep.subr.mxu0 0.0
          %428 = vmatpush2.msra.mxu0 0.0
          %429 = vmatprep.subr.mxu0 0.0
          %430 = vmatpush2.msra.mxu0 0.0
          %431 = vmatprep.subr.mxu0 0.0
          %432 = vmatpush2.msra.mxu0 0.0
          %433 = vmatprep.subr.mxu0 0.0
          %434 = vmatpush2.msra.mxu0 0.0
          %435 = vmatprep.subr.mxu0 0.0
          %436 = vmatpush2.msra.mxu0 0.0
          %437 = vmatprep.subr.mxu0 0.0
          %438 = vmatpush2.msra.mxu0 0.0
          %439 = vmatprep.subr.mxu0 0.0
          %440 = vmatpush2.msra.mxu0 0.0
          %441 = vmatprep.subr.mxu0 0.0
          %442 = vmatpush2.msra.mxu0 0.0
          %443 = vmatprep.mubr.f32.mxu0 0.0
          %444 = vmatmul.mubr.f32.gmra.mxu0 %v354
          %v445 = vpop.f32.mrf.mxu0
          %v446 = vadd.f32 %v377, %v445
          %v447 = vpop.f32.mrf.mxu0
          %448 = vmatprep.mubr.f32.mxu0 0.0
          %449 = vmatmul.mubr.f32.gmra.mxu0 %v355
          %v450 = vpop.f32.mrf.mxu0
          %v451 = vadd.f32 %v377, %v450
          %v452 = vpop.f32.mrf.mxu0
          %453 = vdwg.mxu0
          %454 = vst [vmem:[#allocation2] sm:$0xff] %v446
          %455 = vst [vmem:[#allocation2 + $0x8] sm:$0xff] %v451
        $region52: #{tpu_custom_call.1} parent=39 // pred_fallthru
          _
        %s456 = smul.u32 %s27, 16
        %v457 = vld [vmem:[#allocation8] sm:$0xff]
        %v458 = vld [vmem:[#allocation8 + $0x8] sm:$0xff]
        %v459 = vld [vmem:[#allocation2] sm:$0xff]
        %v460 = vld [vmem:[#allocation2 + $0x8] sm:$0xff]
        %vm461 = vcmask 130048
        %v463 = vsel %vm461, %v457, 0
        %v466 = vsel %vm461, %v458, 0
        %468 = vmatprep.subr.mxu0 0.0
        %469 = vmatpush1.msra.mxu0 0.0
        %470 = vmatprep.subr.mxu0 0.0
        %471 = vmatpush1.msra.mxu0 0.0
        %472 = vmatprep.subr.mxu0 0.0
        %473 = vmatpush1.msra.mxu0 0.0
        %474 = vmatprep.subr.mxu0 0.0
        %475 = vmatpush1.msra.mxu0 0.0
        %476 = vmatprep.subr.mxu0 0.0
        %477 = vmatpush1.msra.mxu0 0.0
        %478 = vmatprep.subr.mxu0 0.0
        %479 = vmatpush1.msra.mxu0 0.0
        %480 = vmatprep.subr.mxu0 0.0
        %481 = vmatpush1.msra.mxu0 0.0
        %482 = vmatprep.subr.mxu0 0.0
        %483 = vmatpush1.msra.mxu0 0.0
        %484 = vmatprep.subr.mxu0 0.0
        %485 = vmatpush1.msra.mxu0 0.0
        %486 = vmatprep.subr.mxu0 0.0
        %487 = vmatpush1.msra.mxu0 0.0
        %488 = vmatprep.subr.mxu0 0.0
        %489 = vmatpush1.msra.mxu0 0.0
        %490 = vmatprep.subr.mxu0 0.0
        %491 = vmatpush1.msra.mxu0 0.0
        %492 = vmatprep.subr.mxu0 0.0
        %493 = vmatpush1.msra.mxu0 0.0
        %494 = vmatprep.subr.mxu0 0.0
        %495 = vmatpush1.msra.mxu0 0.0
        %496 = vmatprep.subr.mxu0 0.0
        %497 = vmatpush1.msra.mxu0 %v460
        %498 = vmatprep.subr.mxu0 0.0
        %499 = vmatpush1.msra.mxu0 %v459
        %500 = vmatprep.subr.mxu0 0.0
        %501 = vmatpush2.msra.mxu0 0.0
        %502 = vmatprep.subr.mxu0 0.0
        %503 = vmatpush2.msra.mxu0 0.0
        %504 = vmatprep.subr.mxu0 0.0
        %505 = vmatpush2.msra.mxu0 0.0
        %506 = vmatprep.subr.mxu0 0.0
        %507 = vmatpush2.msra.mxu0 0.0
        %508 = vmatprep.subr.mxu0 0.0
        %509 = vmatpush2.msra.mxu0 0.0
        %510 = vmatprep.subr.mxu0 0.0
        %511 = vmatpush2.msra.mxu0 0.0
        %512 = vmatprep.subr.mxu0 0.0
        %513 = vmatpush2.msra.mxu0 0.0
        %514 = vmatprep.subr.mxu0 0.0
        %515 = vmatpush2.msra.mxu0 0.0
        %516 = vmatprep.subr.mxu0 0.0
        %517 = vmatpush2.msra.mxu0 0.0
        %518 = vmatprep.subr.mxu0 0.0
        %519 = vmatpush2.msra.mxu0 0.0
        %520 = vmatprep.subr.mxu0 0.0
        %521 = vmatpush2.msra.mxu0 0.0
        %522 = vmatprep.subr.mxu0 0.0
        %523 = vmatpush2.msra.mxu0 0.0
        %524 = vmatprep.subr.mxu0 0.0
        %525 = vmatpush2.msra.mxu0 0.0
        %526 = vmatprep.subr.mxu0 0.0
        %527 = vmatpush2.msra.mxu0 0.0
        %528 = vmatprep.subr.mxu0 0.0
        %529 = vmatpush2.msra.mxu0 0.0
        %530 = vmatprep.subr.mxu0 0.0
        %531 = vmatpush2.msra.mxu0 0.0
        %532 = vmatprep.mubr.f32.mxu0 0.0
        %533 = vmatmul.mubr.f32.gmra.mxu0 %v463
        %v534 = vpop.f32.mrf.mxu0
        %v535 = vadd.f32 0.0, %v534
        %v536 = vpop.f32.mrf.mxu0
        %537 = vmatprep.mubr.f32.mxu0 0.0
        %538 = vmatmul.mubr.f32.gmra.mxu0 %v466
        %v539 = vpop.f32.mrf.mxu0
        %v540 = vadd.f32 0.0, %v539
        %v541 = vpop.f32.mrf.mxu0
        %542 = vdwg.mxu0
        %v543 = vmax.f32 %v535, 0.0
        %v544 = vmax.f32 %v540, 0.0
        %s545 = scalar_lea.vmem [#allocation13], %s456
        %546 = vst [vmem:[%s545] sm:$0xff] %v543
        %547 = vst [vmem:[%s545 + $0x8] sm:$0xff] %v544
        %v548 = vld [vmem:[#allocation3] sm:$0x1]
        %v549 = vadd.f32 %v543, %v544
        %v550 = vrot.slane %v549, 4
        %v551 = vadd.f32 %v549, %v550
        %v552 = vrot.slane %v551, 2
        %v553 = vadd.f32 %v551, %v552
        %v554 = vrot.slane %v553, 1
        %v555 = vadd.f32 %v553, %v554
        %v556 = vadd.f32 %v548, %v555
        %557 = vst [vmem:[#allocation3] sm:$0x1] %v556
        %v558 = vld [vmem:[#allocation4] sm:$0x1]
        %v559 = vmul.f32 %v543, %v543
        %v560 = vmul.f32 %v544, %v544
        %v561 = vadd.f32 %v559, %v560
        %v562 = vrot.slane %v561, 4
        %v563 = vadd.f32 %v561, %v562
        %v564 = vrot.slane %v563, 2
        %v565 = vadd.f32 %v563, %v564
        %v566 = vrot.slane %v565, 1
        %v567 = vadd.f32 %v565, %v566
        %v568 = vadd.f32 %v558, %v567
        %569 = vst [vmem:[#allocation4] sm:$0x1] %v568
        // Predicated region
        $region61: #{tpu_custom_call.1} parent=39 // pred_check
          %p570 = pneg %p310
        $region62: #{tpu_custom_call.1} parent=39 // pred_check_branch
          %572 = sbr.rel (%p570) target = $region64
        $region63: #{tpu_custom_call.1} parent=39 // pred_region
          %v573 = vld [vmem:[#allocation3] sm:$0x1]
          %v574 = vmul.f32 %v573, 0.0625
          %v575 = vld [vmem:[#allocation4] sm:$0x1]
          %v576 = vmul.f32 %v575, 0.0625
          %v577 = vmul.f32 %v574, %v574
          %v578 = vsub.f32 %v576, %v577
          %v579 = vmax.f32 %v578, 0.0
          %v580 = vld [vmem:[%s306] sm:$0x1]
          %v581 = vadd.f32 %v579, 1e-09
          %v582 = vrsqrt.pop %v581
          %v583 = vmul.f32 %v580, %v582
          %v584 = vld [vmem:[%s309] sm:$0x1]
          %v585 = vmul.f32 %v574, %v583
          %v586 = vsub.f32 %v584, %v585
          %587 = vst [vmem:[#allocation5] sm:$0x1] %v583
          %588 = vst [vmem:[#allocation6] sm:$0x1] %v586
          %p589 = scmp.eq.s32.totalorder %s26, 1
          // Predicated region
          $region65: #{tpu_custom_call.1} parent=63 // pred_check
            %p590 = pneg %p589
          $region66: #{tpu_custom_call.1} parent=63 // pred_check_branch
            %592 = sbr.rel (%p590) target = $region68
          $region67: #{tpu_custom_call.1} parent=63 // pred_region
            %v593 = vld [vmem:[#allocation13] sm:$0xff]
            %v594 = vld [vmem:[#allocation13 + $0x8] sm:$0xff]
            %v596 = vlaneseq
            %v597 = vshrl.u32 %v596, 7
            %v598 = vsub.s32 0, %v597
            %v599 = vrot.slane %v583, %v598
            %v601 = vmul.f32 %v593, %v599
            %v602 = vmul.f32 %v594, %v599
            %v604 = vlaneseq
            %v605 = vshrl.u32 %v604, 7
            %v606 = vsub.s32 0, %v605
            %v607 = vrot.slane %v586, %v606
            %v609 = vadd.f32 %v601, %v607
            %v610 = vadd.f32 %v602, %v607
            %611 = vst [vmem:[#allocation13] sm:$0xff] %v609
            %612 = vst [vmem:[#allocation13 + $0x8] sm:$0xff] %v610
          $region68: #{tpu_custom_call.1} parent=63 // pred_fallthru
            _
        $region64: #{tpu_custom_call.1} parent=39 // pred_fallthru
          _
        // Predicated region
        $region69: #{tpu_custom_call.1} parent=39 // pred_check
          %p613 = pneg %p177
        $region70: #{tpu_custom_call.1} parent=39 // pred_check_branch
          %615 = sbr.rel (%p613) target = $region72
        $region71: #{tpu_custom_call.1} parent=39 // pred_region
          %s617 = ssub.s32 256, 256
          %618 = vsyncadd [#allocation10], %s617
          %s619 = sshll.u32 [#allocation13], 4
          %s620 = int_to_ptr.vmem [resolvable:$true] %s619
          %625 = dma.vmem_to_hbm [thread:$0]  %s620, 256, %s6, [#allocation10], 128, 128, 8
        $region72: #{tpu_custom_call.1} parent=39 // pred_fallthru
          _
        // Predicated region
        $region73: #{tpu_custom_call.1} parent=39 // pred_check
          %p626 = pneg %p177
        $region74: #{tpu_custom_call.1} parent=39 // pred_check_branch
          %628 = sbr.rel (%p626) target = $region76
        $region75: #{tpu_custom_call.1} parent=39 // pred_region
          %629 = dma.done [#allocation10], 256
        $region76: #{tpu_custom_call.1} parent=39 // pred_fallthru
          _
      $region40: #{tpu_custom_call.1} parent=5 // pred_fallthru
        _
      %p630 = scmp.le.s32.totalorder 2, %s17
      // Predicated region
      $region77: #{tpu_custom_call.1} parent=5 // pred_check
        %p631 = pneg %p630
      $region78: #{tpu_custom_call.1} parent=5 // pred_check_branch
        %633 = sbr.rel (%p631) target = $region80
      $region79: #{tpu_custom_call.1} parent=5 // pred_region
        %s634 = ssub.s32 %s17, 2
      $region80: #{tpu_custom_call.1} parent=5 // pred_fallthru
        _
    $region6: #{tpu_custom_call.1} parent=1 // loop_footer
      %s21 = sadd.s32 1, %s17
    $region7: #{tpu_custom_call.1} parent=1 // loop_footer_branch
      %16 = sbr.rel target = $region3
    $region8: #{tpu_custom_call.1} parent=1 // loop_exit
      _
    %635 = vsyncpa [#allocation9], 1
    %s636 = scalar_lea.sflag [#allocation9], 1
    %637 = vsyncpa %s636, 1
    %638 = vsyncpa [#allocation12], 1
    %s639 = scalar_lea.sflag [#allocation12], 1
    %640 = vsyncpa %s639, 1
    %641 = vsyncpa [#allocation10], 1
    %s642 = scalar_lea.sflag [#allocation10], 1
    %643 = vsyncpa %s642, 1
  %644 = vsyncmov [#allocation7]
  %s645 = vpop.sfrf %644
  %p646 = scmp.eq.s32.totalorder %s645, 0
  %p647 = pneg %p646
  %649 = shalt.err (%p647)

</llo_original>
